<compile_context>
chip_gen: v7x
topology: tpu7x:2x2x1
jax: 0.10.0
libtpu: 0.0.40
codegen_flags: <defaults>
</compile_context>

<pallas_src>
import functools

import jax
import jax.numpy as jnp
from jax import lax
from jax.experimental import pallas as pl
from jax.experimental.pallas import tpu as pltpu

TEMPERATURE = 0.07
LAMBDA_1 = 0.55   # weight on the prediction loss   (lamba_1 in the torch code)
LAMBDA_2 = 0.45   # weight on the contrastive loss  (lambda_2 in the torch code)
MOMENTUM = 0.99   # EMA coefficient used by update_momentum_encoder

# bf16 MXU operands with f32 accumulation.
_MXU_DTYPE = jnp.bfloat16


# ----------------------------------------------------------------------------
# Kernel 1: streaming EMA + both encoder matmuls, tiled over (N, K)
# ----------------------------------------------------------------------------
def _moco_stream_kernel(xi_ref, xj_ref, wq_ref, wk_ref,
                        zi_ref, zj_ref, wk_new_ref, *, momentum):
    k = pl.program_id(1)                       # reduction step (innermost)

    @pl.when(k == 0)
    def _init():
        zi_ref[...] = jnp.zeros_like(zi_ref)
        zj_ref[...] = jnp.zeros_like(zj_ref)

    # Momentum-encoder weight EMA for this (K, N) block, fused with the matmul:
    # produced in VMEM, consumed immediately, written back exactly once.
    wq = wq_ref[...]
    w_new = momentum * wk_ref[...] + (1.0 - momentum) * wq
    wk_new_ref[...] = w_new

    # Encoder matmuls (bf16 operands, f32 accumulation on the MXU); the z
    # accumulators are the output blocks themselves (resident across K).
    zi_ref[...] += jnp.dot(xi_ref[...], wq.astype(_MXU_DTYPE),
                           preferred_element_type=jnp.float32)
    zj_ref[...] += jnp.dot(xj_ref[...], w_new.astype(_MXU_DTYPE),
                           preferred_element_type=jnp.float32)


# ----------------------------------------------------------------------------
# Kernel 2: tiny epilogue — bias EMA, tanh, InfoNCE, pre_head, MSE, combine
# ----------------------------------------------------------------------------
def _moco_epilogue_kernel(zi_ref, zj_ref, bq_ref, bk_ref, wp_ref, bp_ref,
                          pred_ref, loss_ref, bk_new_ref,
                          *, momentum, temperature, l1, l2):
    # Bias EMA computed once, reused for both the write-back and z_pos.
    b_new = momentum * bk_ref[...] + (1.0 - momentum) * bq_ref[...]
    bk_new_ref[...] = b_new

    z_i = jnp.tanh(zi_ref[...] + bq_ref[...])      # (B, D) f32
    z_pos = jnp.tanh(zj_ref[...] + b_new)          # (B, D) f32 (no-grad branch)

    # InfoNCE, simplified: softmax rows sum to 1, so
    #   S[i,i] / S.sum(-1) == exp(s_ii - logsumexp_j s_ij)
    # numerically identical to the torch reference (eps added to the ratio
    # before the log, exactly as in the torch code).
    n = z_i.shape[0]
    s = lax.dot_general(z_i, z_pos, (((1,), (1,)), ((), ())),
                        preferred_element_type=jnp.float32) / temperature
    m = jnp.max(s, axis=-1, keepdims=True)
    lse = m + jnp.log(jnp.sum(jnp.exp(s - m), axis=-1, keepdims=True))
    row = lax.broadcasted_iota(jnp.int32, (n, n), 0)
    col = lax.broadcasted_iota(jnp.int32, (n, n), 1)
    s_diag = jnp.sum(jnp.where(row == col, s, 0.0), axis=-1, keepdims=True)
    per_row = -jnp.log(jnp.exp(s_diag - lse) + 1e-5)             # (n, 1)
    closs = jnp.sum(per_row, axis=0, keepdims=True) / n          # (1, 1)

    # pre_head + MSE prediction loss: `target` never leaves VMEM.
    target = jnp.dot(z_i, wp_ref[...],
                     preferred_element_type=jnp.float32) + bp_ref[...]
    diff = target - pred_ref[...]
    cnt = diff.shape[0] * diff.shape[1]
    mse = jnp.sum(jnp.sum(diff * diff, axis=1, keepdims=True),
                  axis=0, keepdims=True) / cnt                   # (1, 1)

    # NOTE: a (1,1) SMEM output would avoid one masked vst, but the epilogue is
    # a single tiny grid step, so the VMEM scalar output is kept for robustness.
    loss_ref[...] = l1 * mse + l2 * closs


def _pick_tile(d, max_t):
    """Largest multiple of 128 <= max_t that divides d, else the full extent."""
    if d % 128 != 0:
        return d
    best = 128
    t = 256
    while t <= min(max_t, d):
        if d % t == 0:
            best = t
        t += 128
    return min(best, d)


# ----------------------------------------------------------------------------
# MOCO forward: one streaming pallas_call + one epilogue pallas_call
# ----------------------------------------------------------------------------
def moco_forward(params, x_i, x_j, pred,
                 momentum=MOMENTUM, temperature=TEMPERATURE,
                 l1=LAMBDA_1, l2=LAMBDA_2, max_tk=512, max_tn=1024):
    B, S, F = x_i.shape
    d = S * F
    xi = x_i.reshape(B, d).astype(_MXU_DTYPE)   # bf16 once in the wrapper
    xj = x_j.reshape(B, d).astype(_MXU_DTYPE)
    p = pred.shape[1]

    tk = _pick_tile(d, max_tk)
    tn = _pick_tile(d, max_tn)
    nk = d // tk
    nn = d // tn

    # VMEM budget from the actual tile math (double-buffered pipeline buffers);
    # independent of d thanks to the (tk, tn) weight blocking.
    vmem_bytes = (
        2 * (2 * B * tk * 2)        # xi, xj blocks (bf16)
        + 3 * (2 * tk * tn * 4)     # w_main, w_mom (in) + w_mom_new (out), f32
        + 2 * (2 * B * tn * 4)      # z_i, z_pos output-resident accumulators
    )
    vmem_limit = min(max(int(1.5 * vmem_bytes) + (16 << 20), 32 << 20), 48 << 20)

    zi_raw, zj_raw, w_mom_new = pl.pallas_call(
        functools.partial(_moco_stream_kernel, momentum=momentum),
        grid=(nn, nk),
        in_specs=[
            pl.BlockSpec((B, tk), lambda n, k: (0, k)),    # x_i (flattened, bf16)
            pl.BlockSpec((B, tk), lambda n, k: (0, k)),    # x_j (flattened, bf16)
            pl.BlockSpec((tk, tn), lambda n, k: (k, n)),   # w_main block
            pl.BlockSpec((tk, tn), lambda n, k: (k, n)),   # w_mom block
        ],
        out_specs=[
            pl.BlockSpec((B, tn), lambda n, k: (0, n)),    # z_i pre-activation
            pl.BlockSpec((B, tn), lambda n, k: (0, n)),    # z_pos pre-activation
            pl.BlockSpec((tk, tn), lambda n, k: (k, n)),   # updated w_mom
        ],
        out_shape=(
            jax.ShapeDtypeStruct((B, d), jnp.float32),
            jax.ShapeDtypeStruct((B, d), jnp.float32),
            jax.ShapeDtypeStruct((d, d), jnp.float32),
        ),
        # Update the momentum-encoder weight in place; each (k, n) block is read
        # and written exactly once, so the aliasing stays safe under re-tiling.
        input_output_aliases={3: 2},
        compiler_params=pltpu.CompilerParams(
            dimension_semantics=("parallel", "arbitrary"),  # N parallel, K reduce
            vmem_limit_bytes=vmem_limit,
        ),
    )(xi, xj, params["w_main"], params["w_mom"])

    loss, b_mom_new = pl.pallas_call(
        functools.partial(_moco_epilogue_kernel, momentum=momentum,
                          temperature=temperature, l1=l1, l2=l2),
        out_shape=(
            jax.ShapeDtypeStruct((1, 1), jnp.float32),
            jax.ShapeDtypeStruct((1, d), jnp.float32),
        ),
        input_output_aliases={3: 1},                        # b_mom updated in place
    )(zi_raw, zj_raw, params["b_main"], params["b_mom"],
      params["w_pre"], params["b_pre"], pred)

    new_params = dict(params, w_mom=w_mom_new, b_mom=b_mom_new)
    return loss[0, 0], new_params


# ----------------------------------------------------------------------------
# Pure-JAX reference (literal torch formulas) for correctness validation
# ----------------------------------------------------------------------------
def moco_reference(params, x_i, x_j, pred,
                   momentum=MOMENTUM, temperature=TEMPERATURE,
                   l1=LAMBDA_1, l2=LAMBDA_2):
    B, S, F = x_i.shape
    d = S * F
    xi = x_i.reshape(B, d).astype(jnp.bfloat16)
    xj = x_j.reshape(B, d).astype(jnp.bfloat16)
    w_mom_new = momentum * params["w_mom"] + (1.0 - momentum) * params["w_main"]
    b_mom_new = momentum * params["b_mom"] + (1.0 - momentum) * params["b_main"]
    z_i = jnp.tanh(jnp.dot(xi, params["w_main"].astype(jnp.bfloat16),
                           preferred_element_type=jnp.float32) + params["b_main"])
    z_pos = jnp.tanh(jnp.dot(xj, w_mom_new.astype(jnp.bfloat16),
                             preferred_element_type=jnp.float32) + b_mom_new)
    s = (z_i @ z_pos.T) / temperature
    sm = jax.nn.softmax(s, axis=-1)
    diag = jnp.diagonal(sm)
    closs = jnp.mean(-jnp.log(diag / sm.sum(axis=-1) + 1e-5))
    target = z_i @ params["w_pre"] + params["b_pre"]
    mse = jnp.mean((target - pred) ** 2)
    return l1 * mse + l2 * closs, w_mom_new, b_mom_new


def init_params(key, seq_len, feature_dim, pre_len):
    # TODO(synk): main_model / moco_model are injected dependencies in the torch
    # module; modeled here as Linear(seq_len*feature_dim -> seq_len*feature_dim)
    # + tanh encoders (shape-consistent with pre_head).  pred_los is assumed MSE.
    d = seq_len * feature_dim
    k1, k2, k3, k4 = jax.random.split(key, 4)
    return {
        "w_main": 0.1 * jax.random.normal(k1, (d, d), jnp.float32),
        "b_main": jnp.zeros((1, d), jnp.float32),
        "w_mom": 0.1 * jax.random.normal(k2, (d, d), jnp.float32),
        "b_mom": jnp.zeros((1, d), jnp.float32),
        "w_pre": 0.1 * jax.random.normal(k3, (d, pre_len), jnp.float32),
        "b_pre": 0.01 * jax.random.normal(k4, (1, pre_len), jnp.float32),
    }


if __name__ == "__main__":
    def run_case(seq_len, feature_dim, pre_len, batch, max_tk, max_tn, key):
        kp, kxi, kxj, kpr = jax.random.split(key, 4)
        params = init_params(kp, seq_len, feature_dim, pre_len)
        x_i = jax.random.normal(kxi, (batch, seq_len, feature_dim), jnp.float32)
        x_j = jax.random.normal(kxj, (batch, seq_len, feature_dim), jnp.float32)
        pred = jax.random.normal(kpr, (batch, pre_len), jnp.float32)

        # TODO(synk): the torch `batch_idx == 0` branch is a host-side debug print
        # of `target` and is omitted (target stays in VMEM; never needed in HBM).
        fwd = jax.jit(functools.partial(moco_forward, max_tk=max_tk, max_tn=max_tn))
        loss, new_params = fwd(params, x_i, x_j, pred)
        jax.block_until_ready((loss, new_params))

        ref_loss, ref_w, ref_b = moco_reference(params, x_i, x_j, pred)

        assert loss.shape == () and bool(jnp.isfinite(loss))
        assert bool(jnp.allclose(loss, ref_loss, rtol=2e-2, atol=2e-2)), (loss, ref_loss)
        assert bool(jnp.allclose(new_params["w_mom"], ref_w, rtol=1e-5, atol=1e-5))
        assert bool(jnp.allclose(new_params["b_mom"], ref_b, rtol=1e-5, atol=1e-5))

    root = jax.random.PRNGKey(0)
    key_a, key_b = jax.random.split(root)

    # Tiny d (=32): full-extent blocks, grid (1, 1).
    run_case(seq_len=8, feature_dim=4, pre_len=1, batch=8,
             max_tk=512, max_tn=1024, key=key_a)
    # d=256 with 128-wide tiles: exercises the (N=2, K=2) tiled / accumulating /
    # in-place-aliased streaming path.
    run_case(seq_len=16, feature_dim=16, pre_len=4, batch=8,
             max_tk=128, max_tn=128, key=key_b)

    print("KERNEL_OK")
</pallas_src>

<mosaic_0001>
module attributes {stable_mosaic.version = 11 : i64} {
  func.func @_moco_stream_kernel(%arg0: i32, %arg1: i32, %arg2: memref<8x32xbf16, #tpu.memory_space<vmem>>, %arg3: memref<8x32xbf16, #tpu.memory_space<vmem>>, %arg4: memref<32x32xf32, #tpu.memory_space<vmem>>, %arg5: memref<32x32xf32, #tpu.memory_space<vmem>>, %arg6: memref<8x32xf32, #tpu.memory_space<vmem>>, %arg7: memref<8x32xf32, #tpu.memory_space<vmem>>, %arg8: memref<32x32xf32, #tpu.memory_space<vmem>>) attributes {dimension_semantics = [#tpu.dimension_semantics<parallel>, #tpu.dimension_semantics<arbitrary>], iteration_bounds = array<i64: 1, 1>, scalar_prefetch = 0 : i64, scratch_operands = 0 : i64, tpu.core_type = #tpu.core_type<tc>, window_params = [{transform_indices = @transform_0, window_bounds = array<i64: 8, 32>}, {transform_indices = @transform_1, window_bounds = array<i64: 8, 32>}, {transform_indices = @transform_2, window_bounds = array<i64: 32, 32>}, {transform_indices = @transform_3, window_bounds = array<i64: 32, 32>}, {transform_indices = @transform_4, window_bounds = array<i64: 8, 32>}, {transform_indices = @transform_5, window_bounds = array<i64: 8, 32>}, {transform_indices = @transform_6, window_bounds = array<i64: 32, 32>}]} {
    %c0_i32 = arith.constant 0 : i32
    %0 = arith.cmpi eq, %arg1, %c0_i32 : i32
    %1 = arith.extui %0 : i1 to i32
    %c0_i32_0 = arith.constant 0 : i32
    %2 = arith.cmpi ne, %1, %c0_i32_0 : i32
    scf.if %2 {
      %cst_21 = arith.constant 0.000000e+00 : f32
      %23 = vector.broadcast %cst_21 : f32 to vector<8x32xf32>
      %c0_22 = arith.constant 0 : index
      %c0_23 = arith.constant 0 : index
      %24 = vector.load %arg6[%c0_22, %c0_23] : memref<8x32xf32, #tpu.memory_space<vmem>>, vector<8x32xf32>
      tpu.vector_store %arg6[%c0_22, %c0_23], %23 {strides = array<i32>} : memref<8x32xf32, #tpu.memory_space<vmem>>, vector<8x32xf32>,
      %cst_24 = arith.constant 0.000000e+00 : f32
      %25 = vector.broadcast %cst_24 : f32 to vector<8x32xf32>
      %c0_25 = arith.constant 0 : index
      %c0_26 = arith.constant 0 : index
      %26 = vector.load %arg7[%c0_25, %c0_26] : memref<8x32xf32, #tpu.memory_space<vmem>>, vector<8x32xf32>
      tpu.vector_store %arg7[%c0_25, %c0_26], %25 {strides = array<i32>} : memref<8x32xf32, #tpu.memory_space<vmem>>, vector<8x32xf32>,
    } else {
    }
    %c0 = arith.constant 0 : index
    %c0_1 = arith.constant 0 : index
    %3 = vector.load %arg4[%c0, %c0_1] : memref<32x32xf32, #tpu.memory_space<vmem>>, vector<32x32xf32>
    %c0_2 = arith.constant 0 : index
    %c0_3 = arith.constant 0 : index
    %4 = vector.load %arg5[%c0_2, %c0_3] : memref<32x32xf32, #tpu.memory_space<vmem>>, vector<32x32xf32>
    %cst = arith.constant 9.900000e-01 : f32
    %5 = vector.broadcast %cst : f32 to vector<32x32xf32>
    %6 = arith.mulf %5, %4 : vector<32x32xf32>
    %cst_4 = arith.constant 0.00999999977 : f32
    %7 = vector.broadcast %cst_4 : f32 to vector<32x32xf32>
    %8 = arith.mulf %7, %3 : vector<32x32xf32>
    %9 = arith.addf %6, %8 : vector<32x32xf32>
    %c0_5 = arith.constant 0 : index
    %c0_6 = arith.constant 0 : index
    %10 = vector.load %arg8[%c0_5, %c0_6] : memref<32x32xf32, #tpu.memory_space<vmem>>, vector<32x32xf32>
    tpu.vector_store %arg8[%c0_5, %c0_6], %9 {strides = array<i32>} : memref<32x32xf32, #tpu.memory_space<vmem>>, vector<32x32xf32>,
    %c0_7 = arith.constant 0 : index
    %c0_8 = arith.constant 0 : index
    %11 = vector.load %arg6[%c0_7, %c0_8] : memref<8x32xf32, #tpu.memory_space<vmem>>, vector<8x32xf32>
    %c0_9 = arith.constant 0 : index
    %c0_10 = arith.constant 0 : index
    %12 = vector.load %arg2[%c0_9, %c0_10] : memref<8x32xbf16, #tpu.memory_space<vmem>>, vector<8x32xbf16>
    %13 = arith.truncf %3 : vector<32x32xf32> to vector<32x32xbf16>
    %cst_11 = arith.constant dense<0.000000e+00> : vector<8x32xf32>
    %14 = tpu.matmul %12, %13, %cst_11 {dimension_numbers = #tpu.dot_dimension_numbers<[1], [0], [0], [1], [0, 0, 1, 1], [], []>} : vector<8x32xbf16>, vector<32x32xbf16>, vector<8x32xf32> -> vector<8x32xf32>
    %15 = arith.addf %11, %14 : vector<8x32xf32>
    %c0_12 = arith.constant 0 : index
    %c0_13 = arith.constant 0 : index
    %16 = vector.load %arg6[%c0_12, %c0_13] : memref<8x32xf32, #tpu.memory_space<vmem>>, vector<8x32xf32>
    tpu.vector_store %arg6[%c0_12, %c0_13], %15 {strides = array<i32>} : memref<8x32xf32, #tpu.memory_space<vmem>>, vector<8x32xf32>,
    %c0_14 = arith.constant 0 : index
    %c0_15 = arith.constant 0 : index
    %17 = vector.load %arg7[%c0_14, %c0_15] : memref<8x32xf32, #tpu.memory_space<vmem>>, vector<8x32xf32>
    %c0_16 = arith.constant 0 : index
    %c0_17 = arith.constant 0 : index
    %18 = vector.load %arg3[%c0_16, %c0_17] : memref<8x32xbf16, #tpu.memory_space<vmem>>, vector<8x32xbf16>
    %19 = arith.truncf %9 : vector<32x32xf32> to vector<32x32xbf16>
    %cst_18 = arith.constant dense<0.000000e+00> : vector<8x32xf32>
    %20 = tpu.matmul %18, %19, %cst_18 {dimension_numbers = #tpu.dot_dimension_numbers<[1], [0], [0], [1], [0, 0, 1, 1], [], []>} : vector<8x32xbf16>, vector<32x32xbf16>, vector<8x32xf32> -> vector<8x32xf32>
    %21 = arith.addf %17, %20 : vector<8x32xf32>
    %c0_19 = arith.constant 0 : index
    %c0_20 = arith.constant 0 : index
    %22 = vector.load %arg7[%c0_19, %c0_20] : memref<8x32xf32, #tpu.memory_space<vmem>>, vector<8x32xf32>
    tpu.vector_store %arg7[%c0_19, %c0_20], %21 {strides = array<i32>} : memref<8x32xf32, #tpu.memory_space<vmem>>, vector<8x32xf32>,
    return
  }
  func.func @transform_0(%arg0: i32, %arg1: i32) -> (i32, i32) {
    %c0_i32 = arith.constant 0 : i32
    %c0_i32_0 = arith.constant 0 : i32
    return %c0_i32, %arg1 : i32, i32
  }
  func.func @transform_1(%arg0: i32, %arg1: i32) -> (i32, i32) {
    %c0_i32 = arith.constant 0 : i32
    %c0_i32_0 = arith.constant 0 : i32
    return %c0_i32, %arg1 : i32, i32
  }
  func.func @transform_2(%arg0: i32, %arg1: i32) -> (i32, i32) {
    %c0_i32 = arith.constant 0 : i32
    return %arg1, %arg0 : i32, i32
  }
  func.func @transform_3(%arg0: i32, %arg1: i32) -> (i32, i32) {
    %c0_i32 = arith.constant 0 : i32
    return %arg1, %arg0 : i32, i32
  }
  func.func @transform_4(%arg0: i32, %arg1: i32) -> (i32, i32) {
    %c0_i32 = arith.constant 0 : i32
    %c0_i32_0 = arith.constant 0 : i32
    return %c0_i32, %arg0 : i32, i32
  }
  func.func @transform_5(%arg0: i32, %arg1: i32) -> (i32, i32) {
    %c0_i32 = arith.constant 0 : i32
    %c0_i32_0 = arith.constant 0 : i32
    return %c0_i32, %arg0 : i32, i32
  }
  func.func @transform_6(%arg0: i32, %arg1: i32) -> (i32, i32) {
    %c0_i32 = arith.constant 0 : i32
    return %arg1, %arg0 : i32, i32
  }
}

module attributes {stable_mosaic.version = 11 : i64} {
  func.func @_moco_epilogue_kernel(%arg0: memref<8x32xf32, #tpu.memory_space<vmem>>, %arg1: memref<8x32xf32, #tpu.memory_space<vmem>>, %arg2: memref<1x32xf32, #tpu.memory_space<vmem>>, %arg3: memref<1x32xf32, #tpu.memory_space<vmem>>, %arg4: memref<32x1xf32, #tpu.memory_space<vmem>>, %arg5: memref<1x1xf32, #tpu.memory_space<vmem>>, %arg6: memref<8x1xf32, #tpu.memory_space<vmem>>, %arg7: memref<1x1xf32, #tpu.memory_space<vmem>>, %arg8: memref<1x32xf32, #tpu.memory_space<vmem>>) attributes {dimension_semantics = [], scalar_prefetch = 0 : i64, scratch_operands = 0 : i64, tpu.core_type = #tpu.core_type<tc>} {
    %c0 = arith.constant 0 : index
    %c0_0 = arith.constant 0 : index
    %0 = vector.load %arg3[%c0, %c0_0] : memref<1x32xf32, #tpu.memory_space<vmem>>, vector<1x32xf32>
    %cst = arith.constant 9.900000e-01 : f32
    %1 = vector.broadcast %cst : f32 to vector<1x32xf32>
    %2 = arith.mulf %1, %0 : vector<1x32xf32>
    %c0_1 = arith.constant 0 : index
    %c0_2 = arith.constant 0 : index
    %3 = vector.load %arg2[%c0_1, %c0_2] : memref<1x32xf32, #tpu.memory_space<vmem>>, vector<1x32xf32>
    %cst_3 = arith.constant 0.00999999977 : f32
    %4 = vector.broadcast %cst_3 : f32 to vector<1x32xf32>
    %5 = arith.mulf %4, %3 : vector<1x32xf32>
    %6 = arith.addf %2, %5 : vector<1x32xf32>
    %c0_4 = arith.constant 0 : index
    %c0_5 = arith.constant 0 : index
    %7 = vector.load %arg8[%c0_4, %c0_5] : memref<1x32xf32, #tpu.memory_space<vmem>>, vector<1x32xf32>
    tpu.vector_store %arg8[%c0_4, %c0_5], %6 {strides = array<i32>} : memref<1x32xf32, #tpu.memory_space<vmem>>, vector<1x32xf32>,
    %c0_6 = arith.constant 0 : index
    %c0_7 = arith.constant 0 : index
    %8 = vector.load %arg0[%c0_6, %c0_7] : memref<8x32xf32, #tpu.memory_space<vmem>>, vector<8x32xf32>
    %c0_8 = arith.constant 0 : index
    %c0_9 = arith.constant 0 : index
    %9 = vector.load %arg2[%c0_8, %c0_9] : memref<1x32xf32, #tpu.memory_space<vmem>>, vector<1x32xf32>
    %10 = vector.broadcast %9 : vector<1x32xf32> to vector<8x32xf32>
    %11 = arith.addf %8, %10 : vector<8x32xf32>
    %12 = math.tanh %11 : vector<8x32xf32>
    %c0_10 = arith.constant 0 : index
    %c0_11 = arith.constant 0 : index
    %13 = vector.load %arg1[%c0_10, %c0_11] : memref<8x32xf32, #tpu.memory_space<vmem>>, vector<8x32xf32>
    %14 = vector.broadcast %6 : vector<1x32xf32> to vector<8x32xf32>
    %15 = arith.addf %13, %14 : vector<8x32xf32>
    %16 = math.tanh %15 : vector<8x32xf32>
    %cst_12 = arith.constant dense<0.000000e+00> : vector<8x8xf32>
    %17 = tpu.matmul %12, %16, %cst_12 {dimension_numbers = #tpu.dot_dimension_numbers<[1], [1], [0], [0], [0, 0, 1, 0], [], []>} : vector<8x32xf32>, vector<8x32xf32>, vector<8x8xf32> -> vector<8x8xf32>
    %cst_13 = arith.constant 7.000000e-02 : f32
    %18 = vector.broadcast %cst_13 : f32 to vector<8x8xf32>
    %19 = arith.divf %17, %18 : vector<8x8xf32>
    %cst_14 = arith.constant dense<0xFF800000> : vector<8xf32>
    %20 = vector.multi_reduction <maximumf>, %19, %cst_14 [1] : vector<8x8xf32> to vector<8xf32>
    %21 = vector.shape_cast %20 : vector<8xf32> to vector<8x1xf32>
    %22 = vector.broadcast %21 : vector<8x1xf32> to vector<8x8xf32>
    %23 = arith.subf %19, %22 : vector<8x8xf32>
    %24 = math.exp %23 : vector<8x8xf32>
    %cst_15 = arith.constant dense<0.000000e+00> : vector<8xf32>
    %25 = vector.multi_reduction <add>, %24, %cst_15 [1] : vector<8x8xf32> to vector<8xf32>
    %26 = vector.shape_cast %25 : vector<8xf32> to vector<8x1xf32>
    %27 = math.log %26 : vector<8x1xf32>
    %28 = arith.addf %21, %27 : vector<8x1xf32>
    %29 = tpu.iota {dimensions = array<i32: 0>} : vector<8x8xi32>
    %30 = tpu.iota {dimensions = array<i32: 1>} : vector<8x8xi32>
    %31 = arith.cmpi eq, %29, %30 : vector<8x8xi32>
    %cst_16 = arith.constant 0.000000e+00 : f32
    %32 = vector.broadcast %cst_16 : f32 to vector<8x8xf32>
    %33 = arith.select %31, %19, %32 : vector<8x8xi1>, vector<8x8xf32>
    %cst_17 = arith.constant dense<0.000000e+00> : vector<8xf32>
    %34 = vector.multi_reduction <add>, %33, %cst_17 [1] : vector<8x8xf32> to vector<8xf32>
    %35 = vector.shape_cast %34 : vector<8xf32> to vector<8x1xf32>
    %36 = arith.subf %35, %28 : vector<8x1xf32>
    %37 = math.exp %36 : vector<8x1xf32>
    %cst_18 = arith.constant 9.99999974E-6 : f32
    %38 = vector.broadcast %cst_18 : f32 to vector<8x1xf32>
    %39 = arith.addf %37, %38 : vector<8x1xf32>
    %40 = math.log %39 : vector<8x1xf32>
    %cst_19 = arith.constant 0.000000e+00 : f32
    %41 = vector.broadcast %cst_19 : f32 to vector<8x1xf32>
    %42 = arith.subf %41, %40 : vector<8x1xf32>
    %cst_20 = arith.constant dense<0.000000e+00> : vector<1xf32>
    %43 = vector.multi_reduction <add>, %42, %cst_20 [0] : vector<8x1xf32> to vector<1xf32>
    %44 = vector.shape_cast %43 : vector<1xf32> to vector<1x1xf32>
    %cst_21 = arith.constant 8.000000e+00 : f32
    %45 = vector.broadcast %cst_21 : f32 to vector<1x1xf32>
    %46 = arith.divf %44, %45 : vector<1x1xf32>
    %c0_22 = arith.constant 0 : index
    %c0_23 = arith.constant 0 : index
    %47 = vector.load %arg4[%c0_22, %c0_23] : memref<32x1xf32, #tpu.memory_space<vmem>>, vector<32x1xf32>
    %cst_24 = arith.constant dense<0.000000e+00> : vector<8x1xf32>
    %48 = tpu.matmul %12, %47, %cst_24 {dimension_numbers = #tpu.dot_dimension_numbers<[1], [0], [0], [1], [0, 0, 1, 1], [], []>} : vector<8x32xf32>, vector<32x1xf32>, vector<8x1xf32> -> vector<8x1xf32>
    %c0_25 = arith.constant 0 : index
    %c0_26 = arith.constant 0 : index
    %49 = vector.load %arg5[%c0_25, %c0_26] : memref<1x1xf32, #tpu.memory_space<vmem>>, vector<1x1xf32>
    %50 = vector.broadcast %49 : vector<1x1xf32> to vector<8x1xf32>
    %51 = arith.addf %48, %50 : vector<8x1xf32>
    %c0_27 = arith.constant 0 : index
    %c0_28 = arith.constant 0 : index
    %52 = vector.load %arg6[%c0_27, %c0_28] : memref<8x1xf32, #tpu.memory_space<vmem>>, vector<8x1xf32>
    %53 = arith.subf %51, %52 : vector<8x1xf32>
    %54 = arith.mulf %53, %53 : vector<8x1xf32>
    %cst_29 = arith.constant dense<0.000000e+00> : vector<8xf32>
    %55 = vector.multi_reduction <add>, %54, %cst_29 [1] : vector<8x1xf32> to vector<8xf32>
    %56 = vector.shape_cast %55 : vector<8xf32> to vector<8x1xf32>
    %cst_30 = arith.constant dense<0.000000e+00> : vector<1xf32>
    %57 = vector.multi_reduction <add>, %56, %cst_30 [0] : vector<8x1xf32> to vector<1xf32>
    %58 = vector.shape_cast %57 : vector<1xf32> to vector<1x1xf32>
    %cst_31 = arith.constant 8.000000e+00 : f32
    %59 = vector.broadcast %cst_31 : f32 to vector<1x1xf32>
    %60 = arith.divf %58, %59 : vector<1x1xf32>
    %cst_32 = arith.constant 5.500000e-01 : f32
    %61 = vector.broadcast %cst_32 : f32 to vector<1x1xf32>
    %62 = arith.mulf %61, %60 : vector<1x1xf32>
    %cst_33 = arith.constant 4.500000e-01 : f32
    %63 = vector.broadcast %cst_33 : f32 to vector<1x1xf32>
    %64 = arith.mulf %63, %46 : vector<1x1xf32>
    %65 = arith.addf %62, %64 : vector<1x1xf32>
    %c0_34 = arith.constant 0 : index
    %c0_35 = arith.constant 0 : index
    %66 = vector.load %arg7[%c0_34, %c0_35] : memref<1x1xf32, #tpu.memory_space<vmem>>, vector<1x1xf32>
    tpu.vector_store %arg7[%c0_34, %c0_35], %65 {strides = array<i32>} : memref<1x1xf32, #tpu.memory_space<vmem>>, vector<1x1xf32>,
    return
  }
}

</mosaic_0001>

<llo_original>
// kernel: moco_forward.2
$region0: #{moco_forward.2}
  #allocation0 [shape = 'u32[]', space=smem, size = 0x4, offset = 0x4, fixed_abs, tag = 'smem constant byte address 0x4 - core index']
  #allocation1 [shape = 'u32[144,128]{1,0:T(1,128)}', space=vmem, size = 0x12000, scoped, tag = 'internal scratch']
  %s0 = inlined_call_operand.vmem [shape: bf16[8,32], index: 0, kind: input, shape index: {}]
  %s1 = inlined_call_operand.vmem [shape: bf16[8,32], index: 1, kind: input, shape index: {}]
  %s2 = inlined_call_operand.vmem [shape: f32[32,32], index: 2, kind: input, shape index: {}]
  %s3 = inlined_call_operand.vmem [shape: f32[32,32], index: 3, kind: input, shape index: {}, may-alias: {3,6}]
  %s4 = inlined_call_operand.vmem [shape: f32[8,32], index: 4, kind: output, shape index: {0}]
  %s5 = inlined_call_operand.vmem [shape: f32[8,32], index: 5, kind: output, shape index: {1}]
  %s6 = inlined_call_operand.vmem [shape: f32[32,32], index: 6, kind: output, shape index: {2}, may-alias: {3,6}]
  %7 = xla_tuple %s4, %s5, %s6
  %s8 = sld [smem:[#allocation0]]
  $region46: #{moco_forward.2} parent=0
    _
  %s10 = ssub.s32 1, %s8
  %s11 = scalar_select 0, %s10, %s8
  // Predicated region
  $region2: #{moco_forward.2} parent=0 // pred_check
    _
  $region3: #{moco_forward.2} parent=0 // pred_check_branch
    %13 = sbr.rel (0) target = $region5
  $region4: #{moco_forward.2} parent=0 // pred_region
    _
  $region5: #{moco_forward.2} parent=0 // pred_fallthru
    _
  // Predicated region
  $region6: #{moco_forward.2} parent=0 // pred_check
    _
  $region7: #{moco_forward.2} parent=0 // pred_check_branch
    %15 = sbr.rel (0) target = $region9
  $region8: #{moco_forward.2} parent=0 // pred_region
    _
  $region9: #{moco_forward.2} parent=0 // pred_fallthru
    _
  // Predicated region
  $region10: #{moco_forward.2} parent=0 // pred_check
    _
  $region11: #{moco_forward.2} parent=0 // pred_check_branch
    %17 = sbr.rel (0) target = $region13
  $region12: #{moco_forward.2} parent=0 // pred_region
    _
  $region13: #{moco_forward.2} parent=0 // pred_fallthru
    _
  // Predicated region
  $region14: #{moco_forward.2} parent=0 // pred_check
    _
  $region15: #{moco_forward.2} parent=0 // pred_check_branch
    %19 = sbr.rel (0) target = $region17
  $region16: #{moco_forward.2} parent=0 // pred_region
    _
  $region17: #{moco_forward.2} parent=0 // pred_fallthru
    _
  %p21 = scmp.eq.s32.totalorder 0, 0
  // Predicated region
  $region18: #{moco_forward.2} parent=0 // pred_check
    %p22 = pneg %p21
  $region19: #{moco_forward.2} parent=0 // pred_check_branch
    %24 = sbr.rel (%p22) target = $region21
  $region20: #{moco_forward.2} parent=0 // pred_region
    %vm25 = vcmask 261120
    %26 = vst.msk [vmem:[%s4] sm:$0xff] %vm25, 0.0
    %27 = vst.msk [vmem:[%s5] sm:$0xff] %vm25, 0.0
  $region21: #{moco_forward.2} parent=0 // pred_fallthru
    _
  %v28 = vld [vmem:[%s2] sm:$0xff]
  %v29 = vld [vmem:[%s2 + $0x8] sm:$0xff]
  %v30 = vld [vmem:[%s2 + $0x10] sm:$0xff]
  %v31 = vld [vmem:[%s2 + $0x18] sm:$0xff]
  %v32 = vld [vmem:[%s3] sm:$0xff]
  %v33 = vld [vmem:[%s3 + $0x8] sm:$0xff]
  %v34 = vld [vmem:[%s3 + $0x10] sm:$0xff]
  %v35 = vld [vmem:[%s3 + $0x18] sm:$0xff]
  %v36 = vmul.f32 %v32, 0.99
  %v37 = vmul.f32 %v33, 0.99
  %v38 = vmul.f32 %v34, 0.99
  %v39 = vmul.f32 %v35, 0.99
  %v40 = vmul.f32 %v28, 0.01
  %v41 = vmul.f32 %v29, 0.01
  %v42 = vmul.f32 %v30, 0.01
  %v43 = vmul.f32 %v31, 0.01
  %v44 = vadd.f32 %v36, %v40
  %v45 = vadd.f32 %v37, %v41
  %v46 = vadd.f32 %v38, %v42
  %v47 = vadd.f32 %v39, %v43
  %vm48 = vcmask 261120
  %49 = vst.msk [vmem:[%s6] sm:$0xff] %vm48, %v44
  %50 = vst.msk [vmem:[%s6 + $0x8] sm:$0xff] %vm48, %v45
  %51 = vst.msk [vmem:[%s6 + $0x10] sm:$0xff] %vm48, %v46
  %52 = vst.msk [vmem:[%s6 + $0x18] sm:$0xff] %vm48, %v47
  %v53 = vld [vmem:[%s4] sm:$0xff]
  %v54 = vld [vmem:[%s0] sm:$0xf]
  %v55 = vpack.c.bf16 %v29, %v28
  %v56 = vpack.c.bf16 %v31, %v30
  %v58 = vsel %vm48, %v54, 0
  %60 = vmatprep.subr.bf16.mxu0 0
  %61 = vmatpush1.bf16.msra.mxu0 %v55
  %62 = vmatprep.subr.bf16.mxu0 0
  %63 = vmatpush1.bf16.msra.mxu0 %v56
  %64 = vmatprep.subr.bf16.mxu0 0
  %65 = vmatpush1.bf16.msra.mxu0 0
  %66 = vmatprep.subr.bf16.mxu0 0
  %67 = vmatpush1.bf16.msra.mxu0 0
  %68 = vmatprep.subr.bf16.mxu0 0
  %69 = vmatpush1.bf16.msra.mxu0 0
  %70 = vmatprep.subr.bf16.mxu0 0
  %71 = vmatpush1.bf16.msra.mxu0 0
  %72 = vmatprep.subr.bf16.mxu0 0
  %73 = vmatpush1.bf16.msra.mxu0 0
  %74 = vmatprep.subr.bf16.mxu0 0
  %75 = vmatpush1.bf16.msra.mxu0 0
  %76 = vmatprep.subr.bf16.mxu0 0
  %77 = vmatpush1.bf16.msra.mxu0 0
  %78 = vmatprep.subr.bf16.mxu0 0
  %79 = vmatpush1.bf16.msra.mxu0 0
  %80 = vmatprep.subr.bf16.mxu0 0
  %81 = vmatpush1.bf16.msra.mxu0 0
  %82 = vmatprep.subr.bf16.mxu0 0
  %83 = vmatpush1.bf16.msra.mxu0 0
  %84 = vmatprep.subr.bf16.mxu0 0
  %85 = vmatpush1.bf16.msra.mxu0 0
  %86 = vmatprep.subr.bf16.mxu0 0
  %87 = vmatpush1.bf16.msra.mxu0 0
  %88 = vmatprep.subr.bf16.mxu0 0
  %89 = vmatpush1.bf16.msra.mxu0 0
  %90 = vmatprep.subr.bf16.mxu0 0
  %91 = vmatpush1.bf16.msra.mxu0 0
  %92 = vmatprep.mubr.bf16.mxu0 0
  %93 = vmatmul.mubr.bf16.gmra.mrb[0].mxu0 %v58
  %v94 = vpop.f32.mrb[0].mxu0
  %v95 = vadd.f32 0.0, %v94
  %v96 = vpop.f32.mrb[0].mxu0
  %v97 = vpop.f32.mrb[0].mxu0
  %v98 = vpop.f32.mrb[0].mxu0
  %99 = vdwg.mxu0
  %v100 = vadd.f32 %v53, %v95
  %101 = vst.msk [vmem:[%s4] sm:$0xff] %vm48, %v100
  %v102 = vld [vmem:[%s5] sm:$0xff]
  %v103 = vld [vmem:[%s1] sm:$0xf]
  %v104 = vpack.c.bf16 %v45, %v44
  %v105 = vpack.c.bf16 %v47, %v46
  %v107 = vsel %vm48, %v103, 0
  %109 = vmatprep.subr.bf16.mxu0 0
  %110 = vmatpush1.bf16.msra.mxu0 %v104
  %111 = vmatprep.subr.bf16.mxu0 0
  %112 = vmatpush1.bf16.msra.mxu0 %v105
  %113 = vmatprep.subr.bf16.mxu0 0
  %114 = vmatpush1.bf16.msra.mxu0 0
  %115 = vmatprep.subr.bf16.mxu0 0
  %116 = vmatpush1.bf16.msra.mxu0 0
  %117 = vmatprep.subr.bf16.mxu0 0
  %118 = vmatpush1.bf16.msra.mxu0 0
  %119 = vmatprep.subr.bf16.mxu0 0
  %120 = vmatpush1.bf16.msra.mxu0 0
  %121 = vmatprep.subr.bf16.mxu0 0
  %122 = vmatpush1.bf16.msra.mxu0 0
  %123 = vmatprep.subr.bf16.mxu0 0
  %124 = vmatpush1.bf16.msra.mxu0 0
  %125 = vmatprep.subr.bf16.mxu0 0
  %126 = vmatpush1.bf16.msra.mxu0 0
  %127 = vmatprep.subr.bf16.mxu0 0
  %128 = vmatpush1.bf16.msra.mxu0 0
  %129 = vmatprep.subr.bf16.mxu0 0
  %130 = vmatpush1.bf16.msra.mxu0 0
  %131 = vmatprep.subr.bf16.mxu0 0
  %132 = vmatpush1.bf16.msra.mxu0 0
  %133 = vmatprep.subr.bf16.mxu0 0
  %134 = vmatpush1.bf16.msra.mxu0 0
  %135 = vmatprep.subr.bf16.mxu0 0
  %136 = vmatpush1.bf16.msra.mxu0 0
  %137 = vmatprep.subr.bf16.mxu0 0
  %138 = vmatpush1.bf16.msra.mxu0 0
  %139 = vmatprep.subr.bf16.mxu0 0
  %140 = vmatpush1.bf16.msra.mxu0 0
  %141 = vmatprep.mubr.bf16.mxu0 0
  %142 = vmatmul.mubr.bf16.gmra.mrb[0].mxu0 %v107
  %v143 = vpop.f32.mrb[0].mxu0
  %v144 = vadd.f32 0.0, %v143
  %v145 = vpop.f32.mrb[0].mxu0
  %v146 = vpop.f32.mrb[0].mxu0
  %v147 = vpop.f32.mrb[0].mxu0
  %148 = vdwg.mxu0
  %v149 = vadd.f32 %v102, %v144
  %150 = vst.msk [vmem:[%s5] sm:$0xff] %vm48, %v149
  // Predicated region
  $region22: #{moco_forward.2} parent=0 // pred_check
    _
  $region23: #{moco_forward.2} parent=0 // pred_check_branch
    %152 = sbr.rel (0) target = $region25
  $region24: #{moco_forward.2} parent=0 // pred_region
    _
  $region25: #{moco_forward.2} parent=0 // pred_fallthru
    _
  // Predicated region
  $region26: #{moco_forward.2} parent=0 // pred_check
    _
  $region27: #{moco_forward.2} parent=0 // pred_check_branch
    %154 = sbr.rel (0) target = $region29
  $region28: #{moco_forward.2} parent=0 // pred_region
    _
  $region29: #{moco_forward.2} parent=0 // pred_fallthru
    _
  // Predicated region
  $region30: #{moco_forward.2} parent=0 // pred_check
    _
  $region31: #{moco_forward.2} parent=0 // pred_check_branch
    %156 = sbr.rel (0) target = $region33
  $region32: #{moco_forward.2} parent=0 // pred_region
    _
  $region33: #{moco_forward.2} parent=0 // pred_fallthru
    _
  // Predicated region
  $region34: #{moco_forward.2} parent=0 // pred_check
    _
  $region35: #{moco_forward.2} parent=0 // pred_check_branch
    %158 = sbr.rel (0) target = $region37
  $region36: #{moco_forward.2} parent=0 // pred_region
    _
  $region37: #{moco_forward.2} parent=0 // pred_fallthru
    _
  // Predicated region
  $region38: #{moco_forward.2} parent=0 // pred_check
    _
  $region39: #{moco_forward.2} parent=0 // pred_check_branch
    %160 = sbr.rel (0) target = $region41
  $region40: #{moco_forward.2} parent=0 // pred_region
    _
  $region41: #{moco_forward.2} parent=0 // pred_fallthru
    _
  // Predicated region
  $region42: #{moco_forward.2} parent=0 // pred_check
    _
  $region43: #{moco_forward.2} parent=0 // pred_check_branch
    %162 = sbr.rel (0) target = $region45
  $region44: #{moco_forward.2} parent=0 // pred_region
    _
  $region45: #{moco_forward.2} parent=0 // pred_fallthru
    _

// kernel: moco_forward.3
$region0: #{moco_forward.3}
  #allocation0 [shape = 'u32[]', space=smem, size = 0x4, offset = 0x4, fixed_abs, tag = 'smem constant byte address 0x4 - core index']
  #allocation1 [shape = 'u32[144,128]{1,0:T(1,128)}', space=vmem, size = 0x12000, scoped, tag = 'internal scratch']
  #allocation2 [shape = 'f32[1,1]{1,0:T(1,128)S(1)}', space=vmem, size = 0x200, scoped, tag = 'scoped memory for moco_forward.3']
  %s0 = inlined_call_operand.vmem [shape: f32[8,32], index: 0, kind: input, shape index: {}]
  %s1 = inlined_call_operand.vmem [shape: f32[8,32], index: 1, kind: input, shape index: {}]
  %s2 = inlined_call_operand.vmem [shape: f32[1,32], index: 2, kind: input, shape index: {}]
  %s3 = inlined_call_operand.vmem [shape: f32[1,32], index: 3, kind: input, shape index: {}, may-alias: {3,8}]
  %s4 = inlined_call_operand.vmem [shape: f32[32,1], index: 4, kind: input, shape index: {}]
  %s5 = inlined_call_operand.<no memory space> [shape: f32[1,1], index: 5, kind: input, shape index: {}]
  %s6 = inlined_call_operand.vmem [shape: f32[8,1], index: 6, kind: input, shape index: {}]
  %s7 = inlined_call_operand.hbm [shape: f32[1,1], index: 7, kind: output, shape index: {0}]
  %s8 = inlined_call_operand.vmem [shape: f32[1,32], index: 8, kind: output, shape index: {1}, may-alias: {3,8}]
  %9 = xla_tuple %s7, %s8
  %s10 = sld [smem:[#allocation0]]
  $region46: #{moco_forward.3} parent=0
    _
  %s12 = ssub.s32 1, %s10
  %s13 = scalar_select 0, %s12, %s10
  %v14 = vstv %s5
  %15 = vst [vmem:[#allocation2] sm:$0x1] %v14
  $region1: #{moco_forward.3} parent=0
    #allocation3 [shape = 'u8[512]{0}', space=vmem, size = 0x400, scoped, tag = 'output window, operand 0, single buffered']
    #allocation4 [shape = 's32[1]{0}', space=sflag, size = 0x4, scoped, tag = 'scoped memory for moco_forward.3']
    %16 = vsyncpa [#allocation4], 0
    // Predicated region
    $region2: #{moco_forward.3} parent=1 // pred_check
      _
    $region3: #{moco_forward.3} parent=1 // pred_check_branch
      %18 = sbr.rel (0) target = $region5
    $region4: #{moco_forward.3} parent=1 // pred_region
      _
    $region5: #{moco_forward.3} parent=1 // pred_fallthru
      _
    // Predicated region
    $region6: #{moco_forward.3} parent=1 // pred_check
      _
    $region7: #{moco_forward.3} parent=1 // pred_check_branch
      %20 = sbr.rel (0) target = $region9
    $region8: #{moco_forward.3} parent=1 // pred_region
      _
    $region9: #{moco_forward.3} parent=1 // pred_fallthru
      _
    // Predicated region
    $region10: #{moco_forward.3} parent=1 // pred_check
      _
    $region11: #{moco_forward.3} parent=1 // pred_check_branch
      %22 = sbr.rel (0) target = $region13
    $region12: #{moco_forward.3} parent=1 // pred_region
      _
    $region13: #{moco_forward.3} parent=1 // pred_fallthru
      _
    // Predicated region
    $region14: #{moco_forward.3} parent=1 // pred_check
      _
    $region15: #{moco_forward.3} parent=1 // pred_check_branch
      %24 = sbr.rel (0) target = $region17
    $region16: #{moco_forward.3} parent=1 // pred_region
      _
    $region17: #{moco_forward.3} parent=1 // pred_fallthru
      _
    // Predicated region
    $region18: #{moco_forward.3} parent=1 // pred_check
      _
    $region19: #{moco_forward.3} parent=1 // pred_check_branch
      %26 = sbr.rel (0) target = $region21
    $region20: #{moco_forward.3} parent=1 // pred_region
      _
    $region21: #{moco_forward.3} parent=1 // pred_fallthru
      _
    // Predicated region
    $region22: #{moco_forward.3} parent=1 // pred_check
      _
    $region23: #{moco_forward.3} parent=1 // pred_check_branch
      %28 = sbr.rel (0) target = $region25
    $region24: #{moco_forward.3} parent=1 // pred_region
      _
    $region25: #{moco_forward.3} parent=1 // pred_fallthru
      _
    // Predicated region
    $region26: #{moco_forward.3} parent=1 // pred_check
      _
    $region27: #{moco_forward.3} parent=1 // pred_check_branch
      %30 = sbr.rel (0) target = $region29
    $region28: #{moco_forward.3} parent=1 // pred_region
      _
    $region29: #{moco_forward.3} parent=1 // pred_fallthru
      _
    %v31 = vld [vmem:[%s3] sm:$0x1]
    %v32 = vmul.f32 %v31, 0.99
    %v33 = vld [vmem:[%s2] sm:$0x1]
    %v34 = vmul.f32 %v33, 0.01
    %v35 = vadd.f32 %v32, %v34
    %vm36 = vcmask 253952
    %37 = vst.msk [vmem:[%s8] sm:$0x1] %vm36, %v35
    %v38 = vld [vmem:[%s0] sm:$0xff]
    %v39 = vld [vmem:[%s2] sm:$0x1]
    %v41 = vlaneseq
    %v42 = vshrl.u32 %v41, 7
    %v43 = vsub.s32 0, %v42
    %v44 = vrot.slane %v39, %v43
    %v46 = vadd.f32 %v38, %v44
    %v47 = vtanh.pop %v46
    %v48 = vld [vmem:[%s1] sm:$0xff]
    %v50 = vlaneseq
    %v51 = vshrl.u32 %v50, 7
    %v52 = vsub.s32 0, %v51
    %v53 = vrot.slane %v35, %v52
    %v55 = vadd.f32 %v48, %v53
    %v56 = vtanh.pop %v55
    %vm57 = vcmask 261120
    %v59 = vsel %vm57, %v47, 0
    %v62 = vsel %vm57, %v56, 0
    %64 = vmatprep.subr.mxu0 0.0
    %65 = vmatpush1.xpose.msra.mxu0 %v62
    %66 = vmatprep.subr.mxu0 0.0
    %67 = vmatpush1.xpose.msra.mxu0 0.0
    %68 = vmatprep.subr.mxu0 0.0
    %69 = vmatpush1.xpose.msra.mxu0 0.0
    %70 = vmatprep.subr.mxu0 0.0
    %71 = vmatpush1.xpose.msra.mxu0 0.0
    %72 = vmatprep.subr.mxu0 0.0
    %73 = vmatpush1.xpose.msra.mxu0 0.0
    %74 = vmatprep.subr.mxu0 0.0
    %75 = vmatpush1.xpose.msra.mxu0 0.0
    %76 = vmatprep.subr.mxu0 0.0
    %77 = vmatpush1.xpose.msra.mxu0 0.0
    %78 = vmatprep.subr.mxu0 0.0
    %79 = vmatpush1.xpose.msra.mxu0 0.0
    %80 = vmatprep.subr.mxu0 0.0
    %81 = vmatpush1.xpose.msra.mxu0 0.0
    %82 = vmatprep.subr.mxu0 0.0
    %83 = vmatpush1.xpose.msra.mxu0 0.0
    %84 = vmatprep.subr.mxu0 0.0
    %85 = vmatpush1.xpose.msra.mxu0 0.0
    %86 = vmatprep.subr.mxu0 0.0
    %87 = vmatpush1.xpose.msra.mxu0 0.0
    %88 = vmatprep.subr.mxu0 0.0
    %89 = vmatpush1.xpose.msra.mxu0 0.0
    %90 = vmatprep.subr.mxu0 0.0
    %91 = vmatpush1.xpose.msra.mxu0 0.0
    %92 = vmatprep.subr.mxu0 0.0
    %93 = vmatpush1.xpose.msra.mxu0 0.0
    %94 = vmatprep.subr.mxu0 0.0
    %95 = vmatpush1.xpose.msra.mxu0 0.0
    %96 = vmatprep.subr.mxu0 0.0
    %97 = vmatpush1.xpose.msra.mxu0 0.0
    %98 = vmatprep.subr.mxu0 0.0
    %99 = vmatpush1.xpose.msra.mxu0 0.0
    %100 = vmatprep.subr.mxu0 0.0
    %101 = vmatpush1.xpose.msra.mxu0 0.0
    %102 = vmatprep.subr.mxu0 0.0
    %103 = vmatpush1.xpose.msra.mxu0 0.0
    %104 = vmatprep.subr.mxu0 0.0
    %105 = vmatpush1.xpose.msra.mxu0 0.0
    %106 = vmatprep.subr.mxu0 0.0
    %107 = vmatpush1.xpose.msra.mxu0 0.0
    %108 = vmatprep.subr.mxu0 0.0
    %109 = vmatpush1.xpose.msra.mxu0 0.0
    %110 = vmatprep.subr.mxu0 0.0
    %111 = vmatpush1.xpose.msra.mxu0 0.0
    %112 = vmatprep.subr.mxu0 0.0
    %113 = vmatpush1.xpose.msra.mxu0 0.0
    %114 = vmatprep.subr.mxu0 0.0
    %115 = vmatpush1.xpose.msra.mxu0 0.0
    %116 = vmatprep.subr.mxu0 0.0
    %117 = vmatpush1.xpose.msra.mxu0 0.0
    %118 = vmatprep.subr.mxu0 0.0
    %119 = vmatpush1.xpose.msra.mxu0 0.0
    %120 = vmatprep.subr.mxu0 0.0
    %121 = vmatpush1.xpose.msra.mxu0 0.0
    %122 = vmatprep.subr.mxu0 0.0
    %123 = vmatpush1.xpose.msra.mxu0 0.0
    %124 = vmatprep.subr.mxu0 0.0
    %125 = vmatpush1.xpose.msra.mxu0 0.0
    %126 = vmatprep.subr.mxu0 0.0
    %127 = vmatpush1.xpose.msra.mxu0 0.0
    %128 = vmatprep.mubr.f32.mxu0 0.0
    %129 = vmatmul.mubr.f32.gmra.mrb[0].mxu0 %v59
    %v130 = vpop.f32.mrb[0].mxu0
    %v131 = vadd.f32 0.0, %v130
    %v132 = vpop.f32.mrb[0].mxu0
    %133 = vdwg.mxu0
    %v134 = vrcp.pop 0.07
    %v135 = vmul.f32 %v131, %v134
    %vm136 = vcmask 64512
    %v137 = vsel %vm136, %v135, -inf
    %138 = vmax.xlane.f32.xlu0 %v137
    %v139 = vpop.xlane.xlu0 %138
    %v140 = vsub.f32 %v135, %v139
    %v141 = vmul.f32 %v140, 1.442695
    %v142 = vpow.pop %v141
    %v143 = vsel %vm136, %v142, 0.0
    %144 = vadd.xlane.f32.xlu0 %v143
    %v145 = vpop.xlane.xlu0 %144
    %v146 = vlog2.pop %v145
    %v147 = vmul.f32 %v146, 0.6931472
    %v148 = vadd.f32 %v139, %v147
    %v149 = vlaneseq
    %v150 = vshrl.u32 %v149, 7
    %v151 = vlaneseq
    %v152 = vand.u32 %v151, 127
    %vm153 = vcmp.eq.s32.totalorder %v150, %v152
    %v154 = vsel %vm153, %v135, 0.0
    %v155 = vsel %vm136, %v154, 0.0
    %156 = vadd.xlane.f32.xlu0 %v155
    %v157 = vpop.xlane.xlu0 %156
    %v158 = vsub.f32 %v157, %v148
    %v159 = vmul.f32 %v158, 1.442695
    %v160 = vpow.pop %v159
    %v161 = vadd.f32 %v160, 1e-05
    %v162 = vlog2.pop %v161
    %v163 = vmul.f32 %v162, 0.6931472
    %v164 = vsub.f32 0.0, %v163
    %v165 = vrot.slane %v164, 4
    %v166 = vadd.f32 %v164, %v165
    %v167 = vrot.slane %v166, 2
    %v168 = vadd.f32 %v166, %v167
    %v169 = vrot.slane %v168, 1
    %v170 = vadd.f32 %v168, %v169
    %v171 = vrcp.pop 8.0
    %v172 = vmul.f32 %v170, %v171
    %v173 = vld [vmem:[%s4] sm:$0xff]
    %v174 = vld [vmem:[%s4 + $0x8] sm:$0xff]
    %v175 = vld [vmem:[%s4 + $0x10] sm:$0xff]
    %v176 = vld [vmem:[%s4 + $0x18] sm:$0xff]
    %v177 = vld [vmem:[#allocation2] sm:$0x1]
    %v179 = vlaneseq
    %v180 = vshrl.u32 %v179, 7
    %v181 = vsub.s32 0, %v180
    %v182 = vrot.slane %v177, %v181
    %184 = vmatprep.subr.mxu0 0.0
    %185 = vmatpush1.msra.mxu0 %v173
    %186 = vmatprep.subr.mxu0 0.0
    %187 = vmatpush1.msra.mxu0 %v174
    %188 = vmatprep.subr.mxu0 0.0
    %189 = vmatpush1.msra.mxu0 %v175
    %190 = vmatprep.subr.mxu0 0.0
    %191 = vmatpush1.msra.mxu0 %v176
    %192 = vmatprep.subr.mxu0 0.0
    %193 = vmatpush1.msra.mxu0 0.0
    %194 = vmatprep.subr.mxu0 0.0
    %195 = vmatpush1.msra.mxu0 0.0
    %196 = vmatprep.subr.mxu0 0.0
    %197 = vmatpush1.msra.mxu0 0.0
    %198 = vmatprep.subr.mxu0 0.0
    %199 = vmatpush1.msra.mxu0 0.0
    %200 = vmatprep.subr.mxu0 0.0
    %201 = vmatpush1.msra.mxu0 0.0
    %202 = vmatprep.subr.mxu0 0.0
    %203 = vmatpush1.msra.mxu0 0.0
    %204 = vmatprep.subr.mxu0 0.0
    %205 = vmatpush1.msra.mxu0 0.0
    %206 = vmatprep.subr.mxu0 0.0
    %207 = vmatpush1.msra.mxu0 0.0
    %208 = vmatprep.subr.mxu0 0.0
    %209 = vmatpush1.msra.mxu0 0.0
    %210 = vmatprep.subr.mxu0 0.0
    %211 = vmatpush1.msra.mxu0 0.0
    %212 = vmatprep.subr.mxu0 0.0
    %213 = vmatpush1.msra.mxu0 0.0
    %214 = vmatprep.subr.mxu0 0.0
    %215 = vmatpush1.msra.mxu0 0.0
    %216 = vmatprep.subr.mxu0 0.0
    %217 = vmatpush1.msra.mxu0 0.0
    %218 = vmatprep.subr.mxu0 0.0
    %219 = vmatpush1.msra.mxu0 0.0
    %220 = vmatprep.subr.mxu0 0.0
    %221 = vmatpush1.msra.mxu0 0.0
    %222 = vmatprep.subr.mxu0 0.0
    %223 = vmatpush1.msra.mxu0 0.0
    %224 = vmatprep.subr.mxu0 0.0
    %225 = vmatpush1.msra.mxu0 0.0
    %226 = vmatprep.subr.mxu0 0.0
    %227 = vmatpush1.msra.mxu0 0.0
    %228 = vmatprep.subr.mxu0 0.0
    %229 = vmatpush1.msra.mxu0 0.0
    %230 = vmatprep.subr.mxu0 0.0
    %231 = vmatpush1.msra.mxu0 0.0
    %232 = vmatprep.subr.mxu0 0.0
    %233 = vmatpush1.msra.mxu0 0.0
    %234 = vmatprep.subr.mxu0 0.0
    %235 = vmatpush1.msra.mxu0 0.0
    %236 = vmatprep.subr.mxu0 0.0
    %237 = vmatpush1.msra.mxu0 0.0
    %238 = vmatprep.subr.mxu0 0.0
    %239 = vmatpush1.msra.mxu0 0.0
    %240 = vmatprep.subr.mxu0 0.0
    %241 = vmatpush1.msra.mxu0 0.0
    %242 = vmatprep.subr.mxu0 0.0
    %243 = vmatpush1.msra.mxu0 0.0
    %244 = vmatprep.subr.mxu0 0.0
    %245 = vmatpush1.msra.mxu0 0.0
    %246 = vmatprep.subr.mxu0 0.0
    %247 = vmatpush1.msra.mxu0 0.0
    %248 = vmatprep.mubr.f32.mxu0 0.0
    %249 = vmatmul.mubr.f32.gmra.mrb[0].mxu0 %v59
    %v250 = vpop.f32.mrb[0].mxu0
    %v251 = vadd.f32 %v182, %v250
    %v252 = vpop.f32.mrb[0].mxu0
    %253 = vdwg.mxu0
    %v254 = vld [vmem:[%s6] sm:$0xff]
    %v255 = vsub.f32 %v251, %v254
    %v256 = vmul.f32 %v255, %v255
    %v257 = vadd.f32 %v256, 0.0
    %vm258 = vcmask 7168
    %v259 = vsel %vm258, %v257, 0.0
    %v260 = vrot.slane %v259, 4
    %v261 = vadd.f32 %v259, %v260
    %v262 = vrot.slane %v261, 2
    %v263 = vadd.f32 %v261, %v262
    %v264 = vrot.slane %v263, 1
    %v265 = vadd.f32 %v263, %v264
    %v266 = vmul.f32 %v265, %v171
    %v267 = vmul.f32 %v266, 0.55
    %v268 = vmul.f32 %v172, 0.45
    %v269 = vadd.f32 %v267, %v268
    %vm270 = vcmask 0
    %271 = vst.msk [vmem:[#allocation3] sm:$0x1] %vm270, %v269
    // Predicated region
    $region30: #{moco_forward.3} parent=1 // pred_check
      _
    $region31: #{moco_forward.3} parent=1 // pred_check_branch
      %273 = sbr.rel (0) target = $region33
    $region32: #{moco_forward.3} parent=1 // pred_region
      %s275 = ssub.s32 16, 16
      %276 = vsyncadd [#allocation4], %s275
      %s278 = sshll.u32 [#allocation3], 4
      %s279 = int_to_ptr.vmem [resolvable:$true] %s278
      %281 = dma.vmem_to_hbm [thread:$0]  %s279, 16, %s7, [#allocation4]
    $region33: #{moco_forward.3} parent=1 // pred_fallthru
      _
    // Predicated region
    $region34: #{moco_forward.3} parent=1 // pred_check
      _
    $region35: #{moco_forward.3} parent=1 // pred_check_branch
      %283 = sbr.rel (0) target = $region37
    $region36: #{moco_forward.3} parent=1 // pred_region
      _
    $region37: #{moco_forward.3} parent=1 // pred_fallthru
      _
    // Predicated region
    $region38: #{moco_forward.3} parent=1 // pred_check
      _
    $region39: #{moco_forward.3} parent=1 // pred_check_branch
      %285 = sbr.rel (0) target = $region41
    $region40: #{moco_forward.3} parent=1 // pred_region
      %286 = dma.done [#allocation4], 16
    $region41: #{moco_forward.3} parent=1 // pred_fallthru
      _
    // Predicated region
    $region42: #{moco_forward.3} parent=1 // pred_check
      _
    $region43: #{moco_forward.3} parent=1 // pred_check_branch
      %288 = sbr.rel (0) target = $region45
    $region44: #{moco_forward.3} parent=1 // pred_region
      _
    $region45: #{moco_forward.3} parent=1 // pred_fallthru
      _
    %289 = vsyncpa [#allocation4], 1

</llo_original>
